<compile_context>
chip_gen: v6e
topology: v6e:2x2x1
jax: 0.10.0
libtpu: 0.0.40
codegen_flags: <defaults>
</compile_context>

<pallas_src>
import math

import jax
import jax.numpy as jnp
from jax.experimental import pallas as pl
from jax.experimental.pallas import tpu as pltpu

_BN_EPS = 1e-5


def _batchnorm(h, gamma, beta):
    # BatchNorm1d(track_running_stats=False): batch stats, biased variance.
    mean = jnp.mean(h, axis=0, keepdims=True)
    centered = h - mean
    var = jnp.mean(centered * centered, axis=0, keepdims=True)
    return centered * jax.lax.rsqrt(var + _BN_EPS) * gamma + beta


def _prefix_kernel(x_ref, w1_ref, bnp1_ref, h1_ref):
    """Sample-invariant prefix: h1 = relu(BN1(x @ W1 + b1)). Runs once."""
    b1 = bnp1_ref[0:1, :]
    g1 = bnp1_ref[1:2, :]
    be1 = bnp1_ref[2:3, :]
    h = jnp.dot(x_ref[...], w1_ref[...],
                preferred_element_type=jnp.float32) + b1
    h = _batchnorm(h, g1, be1)
    h1_ref[...] = jnp.maximum(h, 0.0)


def _mc_sample_kernel(h1_ref, m1_ref, w2_ref, bnp2_ref, m2_ref,
                      w3_ref, b3_ref, out_ref):
    """Per-MC-sample suffix: dropout -> fc2 -> bn2 -> relu -> dropout -> fc3."""
    b2 = bnp2_ref[0:1, :]
    g2 = bnp2_ref[1:2, :]
    be2 = bnp2_ref[2:3, :]

    # Masks are pre-scaled by 1/(1-p): values in {0, 1/keep} -> one multiply.
    h = h1_ref[...] * m1_ref[0]
    h = jnp.dot(h, w2_ref[...], preferred_element_type=jnp.float32) + b2
    h = _batchnorm(h, g2, be2)
    h = jnp.maximum(h, 0.0)
    h = h * m2_ref[0]
    out = jnp.dot(h, w3_ref[...], preferred_element_type=jnp.float32) + b3_ref[...]
    out_ref[0] = out.astype(out_ref.dtype)


def mc_dropout_forward(x, params, key, dropout_rate, num_mc_samples):
    """Runs `num_mc_samples` stochastic forward passes.

    x: (batch, input_dim) float32
    params: dict from init_params (weights transposed to (in, out))
    key: jax PRNGKey for the MC-dropout masks (deterministic per key/sample)
    Returns: (num_mc_samples, batch, output_dim); slice [s] is one forward().
    """
    assert 0.0 <= dropout_rate < 1.0, "dropout_rate must be in [0, 1)"
    batch, _ = x.shape
    hidden_dim = params["w1"].shape[1]
    output_dim = params["w3"].shape[1]
    keep = 1.0 - dropout_rate

    # ---- sample-invariant prefix (fc1 -> bn1 -> relu), one tiny call ----
    h1 = pl.pallas_call(
        _prefix_kernel,
        out_shape=jax.ShapeDtypeStruct((batch, hidden_dim), jnp.float32),
    )(x, params["w1"], params["bnp1"])

    # ---- precomputed inverted-dropout masks, pre-scaled by 1/keep ----
    k1, k2 = jax.random.split(key)
    m1 = jax.random.bernoulli(k1, keep, (num_mc_samples, batch, hidden_dim))
    m2 = jax.random.bernoulli(k2, keep, (num_mc_samples, batch, hidden_dim))
    m1 = m1.astype(jnp.float32) * (1.0 / keep)
    m2 = m2.astype(jnp.float32) * (1.0 / keep)

    resident2d = lambda s: (0, 0)      # same block every step -> stays in VMEM
    per_sample = lambda s: (s, 0, 0)   # one block per MC sample

    out = pl.pallas_call(
        _mc_sample_kernel,
        out_shape=jax.ShapeDtypeStruct((num_mc_samples, batch, output_dim),
                                       jnp.float32),
        grid=(num_mc_samples,),
        in_specs=[
            pl.BlockSpec((batch, hidden_dim), resident2d),        # h1 (resident)
            pl.BlockSpec((1, batch, hidden_dim), per_sample),     # mask layer 1
            pl.BlockSpec((hidden_dim, hidden_dim), resident2d),   # W2 (resident)
            pl.BlockSpec((3, hidden_dim), resident2d),            # b2/g2/be2 packed
            pl.BlockSpec((1, batch, hidden_dim), per_sample),     # mask layer 2
            pl.BlockSpec((hidden_dim, output_dim), resident2d),   # W3 (resident)
            pl.BlockSpec((1, output_dim), resident2d),            # b3
        ],
        out_specs=pl.BlockSpec((1, batch, output_dim), per_sample),
        compiler_params=pltpu.CompilerParams(
            dimension_semantics=("parallel",)),
    )(h1, m1, params["w2"], params["bnp2"], m2, params["w3"], params["b3"])
    return out


def init_params(key, input_dim, hidden_dim, output_dim):
    """Deterministic init mirroring the PyTorch module's __init__."""
    k1, k2, k3 = jax.random.split(key, 3)
    # torch.rand(out, in) * sqrt(c / fan)  ->  stored transposed as (in, out)
    w1 = (jax.random.uniform(k1, (hidden_dim, input_dim), jnp.float32)
          * math.sqrt(1.0 / input_dim)).T
    w2 = (jax.random.uniform(k2, (hidden_dim, hidden_dim), jnp.float32)
          * math.sqrt(2.0 / hidden_dim)).T
    w3 = (jax.random.uniform(k3, (output_dim, hidden_dim), jnp.float32)
          * math.sqrt(2.0 / hidden_dim)).T
    zeros_h = jnp.zeros((hidden_dim,), jnp.float32)
    ones_h = jnp.ones((hidden_dim,), jnp.float32)
    # Per-layer (bias, gamma, beta) packed into a single (3, H) tile.
    bnp = jnp.stack([zeros_h, ones_h, zeros_h], axis=0)
    params = {
        "w1": w1, "bnp1": bnp,
        "w2": w2, "bnp2": bnp,
        "w3": w3, "b3": jnp.zeros((1, output_dim), jnp.float32),
    }
    # TODO(synk): log_var parameter only enters the NLL loss, not forward().
    return params


if __name__ == "__main__":
    input_dim, hidden_dim, output_dim = 16, 32, 1
    batch = 8
    dropout_rate = 0.1
    num_mc_samples = 16

    key = jax.random.PRNGKey(0)
    pkey, xkey, dkey = jax.random.split(key, 3)
    params = init_params(pkey, input_dim, hidden_dim, output_dim)
    x = jax.random.normal(xkey, (batch, input_dim), jnp.float32)

    out = mc_dropout_forward(x, params, dkey, dropout_rate, num_mc_samples)
    out = jax.block_until_ready(out)

    assert out.shape == (num_mc_samples, batch, output_dim)
    assert bool(jnp.all(jnp.isfinite(out)))
    print("KERNEL_OK")
</pallas_src>

<mosaic_0001>
module attributes {stable_mosaic.version = 11 : i64} {
  func.func @_prefix_kernel(%arg0: memref<8x16xf32, #tpu.memory_space<vmem>>, %arg1: memref<16x32xf32, #tpu.memory_space<vmem>>, %arg2: memref<3x32xf32, #tpu.memory_space<vmem>>, %arg3: memref<8x32xf32, #tpu.memory_space<vmem>>) attributes {dimension_semantics = [], scalar_prefetch = 0 : i64, scratch_operands = 0 : i64, tpu.core_type = #tpu.core_type<tc>} {
    %c0 = arith.constant 0 : index
    %c0_0 = arith.constant 0 : index
    %0 = vector.load %arg2[%c0, %c0_0] : memref<3x32xf32, #tpu.memory_space<vmem>>, vector<1x32xf32>
    %c1 = arith.constant 1 : index
    %c0_1 = arith.constant 0 : index
    %1 = vector.load %arg2[%c1, %c0_1] : memref<3x32xf32, #tpu.memory_space<vmem>>, vector<1x32xf32>
    %c2 = arith.constant 2 : index
    %c0_2 = arith.constant 0 : index
    %2 = vector.load %arg2[%c2, %c0_2] : memref<3x32xf32, #tpu.memory_space<vmem>>, vector<1x32xf32>
    %c0_3 = arith.constant 0 : index
    %c0_4 = arith.constant 0 : index
    %3 = vector.load %arg0[%c0_3, %c0_4] : memref<8x16xf32, #tpu.memory_space<vmem>>, vector<8x16xf32>
    %c0_5 = arith.constant 0 : index
    %c0_6 = arith.constant 0 : index
    %4 = vector.load %arg1[%c0_5, %c0_6] : memref<16x32xf32, #tpu.memory_space<vmem>>, vector<16x32xf32>
    %cst = arith.constant dense<0.000000e+00> : vector<8x32xf32>
    %5 = tpu.matmul %3, %4, %cst {dimension_numbers = #tpu.dot_dimension_numbers<[1], [0], [0], [1], [0, 0, 1, 1], [], []>} : vector<8x16xf32>, vector<16x32xf32>, vector<8x32xf32> -> vector<8x32xf32>
    %6 = vector.broadcast %0 : vector<1x32xf32> to vector<8x32xf32>
    %7 = arith.addf %5, %6 : vector<8x32xf32>
    %cst_7 = arith.constant dense<0.000000e+00> : vector<32xf32>
    %8 = vector.multi_reduction <add>, %7, %cst_7 [0] : vector<8x32xf32> to vector<32xf32>
    %9 = vector.shape_cast %8 : vector<32xf32> to vector<1x32xf32>
    %cst_8 = arith.constant 8.000000e+00 : f32
    %10 = vector.broadcast %cst_8 : f32 to vector<1x32xf32>
    %11 = arith.divf %9, %10 : vector<1x32xf32>
    %12 = vector.broadcast %11 : vector<1x32xf32> to vector<8x32xf32>
    %13 = arith.subf %7, %12 : vector<8x32xf32>
    %14 = arith.mulf %13, %13 : vector<8x32xf32>
    %cst_9 = arith.constant dense<0.000000e+00> : vector<32xf32>
    %15 = vector.multi_reduction <add>, %14, %cst_9 [0] : vector<8x32xf32> to vector<32xf32>
    %16 = vector.shape_cast %15 : vector<32xf32> to vector<1x32xf32>
    %cst_10 = arith.constant 8.000000e+00 : f32
    %17 = vector.broadcast %cst_10 : f32 to vector<1x32xf32>
    %18 = arith.divf %16, %17 : vector<1x32xf32>
    %cst_11 = arith.constant 9.99999974E-6 : f32
    %19 = vector.broadcast %cst_11 : f32 to vector<1x32xf32>
    %20 = arith.addf %18, %19 : vector<1x32xf32>
    %21 = math.rsqrt %20 : vector<1x32xf32>
    %22 = vector.broadcast %21 : vector<1x32xf32> to vector<8x32xf32>
    %23 = arith.mulf %13, %22 : vector<8x32xf32>
    %24 = vector.broadcast %1 : vector<1x32xf32> to vector<8x32xf32>
    %25 = arith.mulf %23, %24 : vector<8x32xf32>
    %26 = vector.broadcast %2 : vector<1x32xf32> to vector<8x32xf32>
    %27 = arith.addf %25, %26 : vector<8x32xf32>
    %cst_12 = arith.constant 0.000000e+00 : f32
    %28 = vector.broadcast %cst_12 : f32 to vector<8x32xf32>
    %29 = arith.maximumf %27, %28 : vector<8x32xf32>
    %c0_13 = arith.constant 0 : index
    %c0_14 = arith.constant 0 : index
    %30 = vector.load %arg3[%c0_13, %c0_14] : memref<8x32xf32, #tpu.memory_space<vmem>>, vector<8x32xf32>
    tpu.vector_store %arg3[%c0_13, %c0_14], %29 {strides = array<i32>} : memref<8x32xf32, #tpu.memory_space<vmem>>, vector<8x32xf32>,
    return
  }
}

</mosaic_0001>

<llo_original>
// kernel: tpu_custom_call.1
$region0: #{tpu_custom_call.1}
  #allocation0 [shape = 'u32[]', space=smem, size = 0x4, offset = 0x4, fixed_abs, tag = 'smem constant byte address 0x4 - core index']
  #allocation1 [shape = 'u32[144,128]{1,0:T(1,128)}', space=vmem, size = 0x12000, scoped, tag = 'internal scratch']
  %s0 = inlined_call_operand.hbm [shape: f32[8,16], index: 0, kind: input, shape index: {}]
  %s1 = inlined_call_operand.hbm [shape: f32[16,32], index: 1, kind: input, shape index: {}]
  %s2 = inlined_call_operand.hbm [shape: f32[3,32], index: 2, kind: input, shape index: {}]
  %s3 = inlined_call_operand.hbm [shape: f32[8,32], index: 3, kind: output, shape index: {}]
  %s4 = sld [smem:[#allocation0]]
  $region34: #{tpu_custom_call.1} parent=0
    _
  %s6 = ssub.s32 1, %s4
  %s7 = scalar_select 0, %s6, %s4
  $region1: #{tpu_custom_call.1} parent=0
    #allocation2 [shape = 'u8[4096]{0}', space=vmem, size = 0x1000, scoped, tag = 'input window, operand 0, single buffered']
    #allocation3 [shape = 's32[1]{0}', space=sflag, size = 0x4, scoped, tag = 'scoped memory for tpu_custom_call.1']
    #allocation4 [shape = 's32[1]{0}', space=sflag, size = 0x4, scoped, tag = 'scoped memory for tpu_custom_call.1']
    #allocation5 [shape = 'u8[8192]{0}', space=vmem, size = 0x2000, scoped, tag = 'input window, operand 1, single buffered']
    #allocation6 [shape = 's32[1]{0}', space=sflag, size = 0x4, scoped, tag = 'scoped memory for tpu_custom_call.1']
    #allocation7 [shape = 'u8[2048]{0}', space=vmem, size = 0x800, scoped, tag = 'input window, operand 2, single buffered']
    #allocation8 [shape = 'u8[4096]{0}', space=vmem, size = 0x1000, scoped, tag = 'output window, operand 0, single buffered']
    %8 = vsyncpa [#allocation3], 0
    %9 = vsyncpa [#allocation6], 0
    %10 = vsyncpa [#allocation4], 0
    // Predicated region
    $region2: #{tpu_custom_call.1} parent=1 // pred_check
      _
    $region3: #{tpu_custom_call.1} parent=1 // pred_check_branch
      %12 = sbr.rel (0) target = $region5
    $region4: #{tpu_custom_call.1} parent=1 // pred_region
      %s14 = ssub.s32 128, 128
      %15 = vsyncadd [#allocation3], %s14
      %s17 = sshll.u32 [#allocation2], 4
      %s18 = int_to_ptr.vmem [resolvable:$true] %s17
      %20 = dma.hbm_to_vmem [thread:$0]  %s0, 128, %s18, [#allocation3]
    $region5: #{tpu_custom_call.1} parent=1 // pred_fallthru
      _
    // Predicated region
    $region6: #{tpu_custom_call.1} parent=1 // pred_check
      _
    $region7: #{tpu_custom_call.1} parent=1 // pred_check_branch
      %22 = sbr.rel (0) target = $region9
    $region8: #{tpu_custom_call.1} parent=1 // pred_region
      %s24 = ssub.s32 256, 256
      %25 = vsyncadd [#allocation6], %s24
      %s26 = sshll.u32 [#allocation5], 4
      %s27 = int_to_ptr.vmem [resolvable:$true] %s26
      %32 = dma.hbm_to_vmem [thread:$0]  %s1, 256, %s27, [#allocation6], 128, 128, 8
    $region9: #{tpu_custom_call.1} parent=1 // pred_fallthru
      _
    // Predicated region
    $region10: #{tpu_custom_call.1} parent=1 // pred_check
      _
    $region11: #{tpu_custom_call.1} parent=1 // pred_check_branch
      %34 = sbr.rel (0) target = $region13
    $region12: #{tpu_custom_call.1} parent=1 // pred_region
      %s36 = ssub.s32 64, 64
      %37 = vsyncadd [#allocation6], %s36
      %s39 = sshll.u32 [#allocation7], 4
      %s40 = int_to_ptr.vmem [resolvable:$true] %s39
      %42 = dma.hbm_to_vmem [thread:$0]  %s2, 64, %s40, [#allocation6]
    $region13: #{tpu_custom_call.1} parent=1 // pred_fallthru
      _
    // Predicated region
    $region14: #{tpu_custom_call.1} parent=1 // pred_check
      _
    $region15: #{tpu_custom_call.1} parent=1 // pred_check_branch
      %44 = sbr.rel (0) target = $region17
    $region16: #{tpu_custom_call.1} parent=1 // pred_region
      %45 = dma.done [#allocation3], 128
    $region17: #{tpu_custom_call.1} parent=1 // pred_fallthru
      _
    // Predicated region
    $region18: #{tpu_custom_call.1} parent=1 // pred_check
      _
    $region19: #{tpu_custom_call.1} parent=1 // pred_check_branch
      %47 = sbr.rel (0) target = $region21
    $region20: #{tpu_custom_call.1} parent=1 // pred_region
      %48 = dma.done [#allocation6], 256
    $region21: #{tpu_custom_call.1} parent=1 // pred_fallthru
      _
    // Predicated region
    $region22: #{tpu_custom_call.1} parent=1 // pred_check
      _
    $region23: #{tpu_custom_call.1} parent=1 // pred_check_branch
      %50 = sbr.rel (0) target = $region25
    $region24: #{tpu_custom_call.1} parent=1 // pred_region
      %51 = dma.done [#allocation6], 64
    $region25: #{tpu_custom_call.1} parent=1 // pred_fallthru
      _
    %v52 = vld [vmem:[#allocation7] sm:$0x1]
    %v53 = vld [vmem:[#allocation7 + $0x1] sm:$0x1]
    %v54 = vld [vmem:[#allocation7 + $0x2] sm:$0x1]
    %v55 = vld [vmem:[#allocation2] sm:$0xff]
    %v56 = vld [vmem:[#allocation5] sm:$0xff]
    %v57 = vld [vmem:[#allocation5 + $0x8] sm:$0xff]
    %v58 = vlaneseq
    %v59 = vshrl.u32 %v58, 7
    %v60 = vsub.s32 0, %v59
    %v61 = vrot.slane %v52, %v60
    %vm62 = vcmask 130048
    %v64 = vsel %vm62, %v55, 0
    %66 = vmatprep.subr.mxu0 0.0
    %67 = vmatpush1.msra.mxu0 0.0
    %68 = vmatprep.subr.mxu0 0.0
    %69 = vmatpush1.msra.mxu0 0.0
    %70 = vmatprep.subr.mxu0 0.0
    %71 = vmatpush1.msra.mxu0 0.0
    %72 = vmatprep.subr.mxu0 0.0
    %73 = vmatpush1.msra.mxu0 0.0
    %74 = vmatprep.subr.mxu0 0.0
    %75 = vmatpush1.msra.mxu0 0.0
    %76 = vmatprep.subr.mxu0 0.0
    %77 = vmatpush1.msra.mxu0 0.0
    %78 = vmatprep.subr.mxu0 0.0
    %79 = vmatpush1.msra.mxu0 0.0
    %80 = vmatprep.subr.mxu0 0.0
    %81 = vmatpush1.msra.mxu0 0.0
    %82 = vmatprep.subr.mxu0 0.0
    %83 = vmatpush1.msra.mxu0 0.0
    %84 = vmatprep.subr.mxu0 0.0
    %85 = vmatpush1.msra.mxu0 0.0
    %86 = vmatprep.subr.mxu0 0.0
    %87 = vmatpush1.msra.mxu0 0.0
    %88 = vmatprep.subr.mxu0 0.0
    %89 = vmatpush1.msra.mxu0 0.0
    %90 = vmatprep.subr.mxu0 0.0
    %91 = vmatpush1.msra.mxu0 0.0
    %92 = vmatprep.subr.mxu0 0.0
    %93 = vmatpush1.msra.mxu0 0.0
    %94 = vmatprep.subr.mxu0 0.0
    %95 = vmatpush1.msra.mxu0 %v57
    %96 = vmatprep.subr.mxu0 0.0
    %97 = vmatpush1.msra.mxu0 %v56
    %98 = vmatprep.subr.mxu0 0.0
    %99 = vmatpush2.msra.mxu0 0.0
    %100 = vmatprep.subr.mxu0 0.0
    %101 = vmatpush2.msra.mxu0 0.0
    %102 = vmatprep.subr.mxu0 0.0
    %103 = vmatpush2.msra.mxu0 0.0
    %104 = vmatprep.subr.mxu0 0.0
    %105 = vmatpush2.msra.mxu0 0.0
    %106 = vmatprep.subr.mxu0 0.0
    %107 = vmatpush2.msra.mxu0 0.0
    %108 = vmatprep.subr.mxu0 0.0
    %109 = vmatpush2.msra.mxu0 0.0
    %110 = vmatprep.subr.mxu0 0.0
    %111 = vmatpush2.msra.mxu0 0.0
    %112 = vmatprep.subr.mxu0 0.0
    %113 = vmatpush2.msra.mxu0 0.0
    %114 = vmatprep.subr.mxu0 0.0
    %115 = vmatpush2.msra.mxu0 0.0
    %116 = vmatprep.subr.mxu0 0.0
    %117 = vmatpush2.msra.mxu0 0.0
    %118 = vmatprep.subr.mxu0 0.0
    %119 = vmatpush2.msra.mxu0 0.0
    %120 = vmatprep.subr.mxu0 0.0
    %121 = vmatpush2.msra.mxu0 0.0
    %122 = vmatprep.subr.mxu0 0.0
    %123 = vmatpush2.msra.mxu0 0.0
    %124 = vmatprep.subr.mxu0 0.0
    %125 = vmatpush2.msra.mxu0 0.0
    %126 = vmatprep.subr.mxu0 0.0
    %127 = vmatpush2.msra.mxu0 0.0
    %128 = vmatprep.subr.mxu0 0.0
    %129 = vmatpush2.msra.mxu0 0.0
    %130 = vmatprep.mubr.f32.mxu0 0.0
    %131 = vmatmul.mubr.f32.gmra.mxu0 %v64
    %v132 = vpop.f32.mrf.mxu0
    %v133 = vadd.f32 %v61, %v132
    %v134 = vpop.f32.mrf.mxu0
    %135 = vdwg.mxu0
    %vm136 = vcmask 261120
    %v137 = vsel %vm136, %v133, 0.0
    %v138 = vrot.slane %v137, 4
    %v139 = vadd.f32 %v137, %v138
    %v140 = vrot.slane %v139, 2
    %v141 = vadd.f32 %v139, %v140
    %v142 = vrot.slane %v141, 1
    %v143 = vadd.f32 %v141, %v142
    %v144 = vrcp.pop 8.0
    %v145 = vmul.f32 %v143, %v144
    %v146 = vsub.f32 %v133, %v145
    %v147 = vmul.f32 %v146, %v146
    %v148 = vsel %vm136, %v147, 0.0
    %v149 = vrot.slane %v148, 4
    %v150 = vadd.f32 %v148, %v149
    %v151 = vrot.slane %v150, 2
    %v152 = vadd.f32 %v150, %v151
    %v153 = vrot.slane %v152, 1
    %v154 = vadd.f32 %v152, %v153
    %v155 = vmul.f32 %v154, %v144
    %v156 = vadd.f32 %v155, 1e-05
    %v157 = vrsqrt.pop %v156
    %v158 = vmul.f32 %v146, %v157
    %v159 = vlaneseq
    %v160 = vshrl.u32 %v159, 7
    %v161 = vsub.s32 0, %v160
    %v162 = vrot.slane %v53, %v161
    %v163 = vmul.f32 %v158, %v162
    %v164 = vlaneseq
    %v165 = vshrl.u32 %v164, 7
    %v166 = vsub.s32 0, %v165
    %v167 = vrot.slane %v54, %v166
    %v168 = vadd.f32 %v163, %v167
    %v169 = vmax.f32 %v168, 0.0
    %170 = vst.msk [vmem:[#allocation8] sm:$0xff] %vm136, %v169
    // Predicated region
    $region26: #{tpu_custom_call.1} parent=1 // pred_check
      _
    $region27: #{tpu_custom_call.1} parent=1 // pred_check_branch
      %172 = sbr.rel (0) target = $region29
    $region28: #{tpu_custom_call.1} parent=1 // pred_region
      %s174 = ssub.s32 128, 128
      %175 = vsyncadd [#allocation4], %s174
      %s177 = sshll.u32 [#allocation8], 4
      %s178 = int_to_ptr.vmem [resolvable:$true] %s177
      %180 = dma.vmem_to_hbm [thread:$0]  %s178, 128, %s3, [#allocation4]
    $region29: #{tpu_custom_call.1} parent=1 // pred_fallthru
      _
    // Predicated region
    $region30: #{tpu_custom_call.1} parent=1 // pred_check
      _
    $region31: #{tpu_custom_call.1} parent=1 // pred_check_branch
      %182 = sbr.rel (0) target = $region33
    $region32: #{tpu_custom_call.1} parent=1 // pred_region
      %183 = dma.done [#allocation4], 128
    $region33: #{tpu_custom_call.1} parent=1 // pred_fallthru
      _
    %184 = vsyncpa [#allocation3], 1
    %185 = vsyncpa [#allocation6], 1
    %186 = vsyncpa [#allocation4], 1

</llo_original>
